<compile_context>
chip_gen: v5e
topology: v5e:2x2
jax: 0.10.0
libtpu: 0.0.40
codegen_flags: <defaults>
</compile_context>

<pallas_src>
import jax
import jax.numpy as jnp
from jax.experimental import pallas as pl
from jax.experimental.pallas import tpu as pltpu

_LANE = 128          # TPU lane width
_SUBLANE = 16        # covers f32 (8) and bf16 (16) sublane packing
_TARGET_COLS = 1024  # lane-dense width (multiple of 128)
_TARGET_ROWS = 512   # row tile: (512, 1024) f32 = 2 MiB per tile


def _exp_kernel(x_ref, o_ref):
    # Elementwise exp on the current VMEM tile (transcendental goes to EUP).
    o_ref[...] = jnp.exp(x_ref[...])


def exp_pallas(x):
    """Elementwise exp via a tiled, lane-dense Pallas TPU kernel."""
    orig_shape = x.shape
    n = x.size
    if n == 0:
        return jnp.exp(x)

    flat = x.reshape(-1)

    # Lane-dense repacking: wide (multiple-of-128) lane axis.
    cols = min(_TARGET_COLS, ((n + _LANE - 1) // _LANE) * _LANE)
    rows = pl.cdiv(n, cols)
    # Round rows up to a sublane multiple so block shapes are always legal.
    rows = ((rows + _SUBLANE - 1) // _SUBLANE) * _SUBLANE

    padded = rows * cols
    if padded != n:
        flat = jnp.pad(flat, (0, padded - n))
    x2 = flat.reshape(rows, cols)

    tm = min(_TARGET_ROWS, rows)
    grid = (pl.cdiv(rows, tm),)

    itemsize = jnp.dtype(x.dtype).itemsize
    out2 = pl.pallas_call(
        _exp_kernel,
        out_shape=jax.ShapeDtypeStruct((rows, cols), x.dtype),
        grid=grid,
        in_specs=[pl.BlockSpec((tm, cols), lambda i: (i, 0))],
        out_specs=pl.BlockSpec((tm, cols), lambda i: (i, 0)),
        compiler_params=pltpu.CompilerParams(
            dimension_semantics=("parallel",),
        ),
        cost_estimate=pl.CostEstimate(
            flops=0,
            transcendentals=padded,
            bytes_accessed=2 * padded * itemsize,
        ),
    )(x2)

    # Strip padding, restore original shape.
    return out2.reshape(-1)[:n].reshape(orig_shape)


if __name__ == "__main__":
    key = jax.random.PRNGKey(0)
    # Small NCHW-style input, consistent with typical distsup usage.
    x = jax.random.normal(key, (2, 4, 16, 16), dtype=jnp.float32)

    y = exp_pallas(x)
    y = jax.block_until_ready(y)

    # Sanity check against the pure-JAX reference.
    y_ref = jnp.exp(x)
    assert y.shape == x.shape and y.dtype == x.dtype
    assert jnp.allclose(y, y_ref, rtol=1e-6, atol=1e-6)

    print("KERNEL_OK")
</pallas_src>

<mosaic_0001>
module attributes {stable_mosaic.version = 11 : i64} {
  func.func @_exp_kernel(%arg0: i32, %arg1: memref<16x1024xf32, #tpu.memory_space<vmem>>, %arg2: memref<16x1024xf32, #tpu.memory_space<vmem>>) attributes {dimension_semantics = [#tpu.dimension_semantics<parallel>], iteration_bounds = array<i64: 1>, scalar_prefetch = 0 : i64, scratch_operands = 0 : i64, tpu.core_type = #tpu.core_type<tc>, window_params = [{transform_indices = @transform_0, window_bounds = array<i64: 16, 1024>}, {transform_indices = @transform_1, window_bounds = array<i64: 16, 1024>}]} {
    %c0 = arith.constant 0 : index
    %c0_0 = arith.constant 0 : index
    %0 = vector.load %arg1[%c0, %c0_0] : memref<16x1024xf32, #tpu.memory_space<vmem>>, vector<16x1024xf32>
    %1 = math.exp %0 : vector<16x1024xf32>
    %c0_1 = arith.constant 0 : index
    %c0_2 = arith.constant 0 : index
    %2 = vector.load %arg2[%c0_1, %c0_2] : memref<16x1024xf32, #tpu.memory_space<vmem>>, vector<16x1024xf32>
    tpu.vector_store %arg2[%c0_1, %c0_2], %1 {strides = array<i32>} : memref<16x1024xf32, #tpu.memory_space<vmem>>, vector<16x1024xf32>,
    return
  }
  func.func @transform_0(%arg0: i32) -> (i32, i32) {
    %c0_i32 = arith.constant 0 : i32
    %c0_i32_0 = arith.constant 0 : i32
    return %arg0, %c0_i32 : i32, i32
  }
  func.func @transform_1(%arg0: i32) -> (i32, i32) {
    %c0_i32 = arith.constant 0 : i32
    %c0_i32_0 = arith.constant 0 : i32
    return %arg0, %c0_i32 : i32, i32
  }
}

</mosaic_0001>

<llo_original>
// kernel: tpu_custom_call.1
$region0: #{tpu_custom_call.1}
  #allocation0 [shape = 'u32[]', space=smem, size = 0x4, offset = 0x4, fixed_abs, tag = 'smem constant byte address 0x4 - core index']
  #allocation1 [shape = 'u32[72,128]{1,0:T(1,128)}', space=vmem, size = 0x9000, scoped, tag = 'internal scratch']
  %s0 = inlined_call_operand.hbm [shape: f32[16,1024], index: 0, kind: input, shape index: {}]
  %s1 = inlined_call_operand.hbm [shape: f32[16,1024], index: 1, kind: output, shape index: {}]
  %s2 = sld [smem:[#allocation0]]
  $region18: #{tpu_custom_call.1} parent=0
    _
  %s4 = ssub.s32 1, %s2
  %s5 = scalar_select 0, %s4, %s2
  $region1: #{tpu_custom_call.1} parent=0
    #allocation2 [shape = 'u8[65536]{0}', space=vmem, size = 0x10000, scoped, tag = 'input window, operand 0, single buffered']
    #allocation3 [shape = 's32[1]{0}', space=sflag, size = 0x4, scoped, tag = 'scoped memory for tpu_custom_call.1']
    #allocation4 [shape = 's32[1]{0}', space=sflag, size = 0x4, scoped, tag = 'scoped memory for tpu_custom_call.1']
    #allocation5 [shape = 'u8[65536]{0}', space=vmem, size = 0x10000, scoped, tag = 'output window, operand 0, single buffered']
    %6 = vsyncpa [#allocation3], 0
    %7 = vsyncpa [#allocation4], 0
    // Predicated region
    $region2: #{tpu_custom_call.1} parent=1 // pred_check
      _
    $region3: #{tpu_custom_call.1} parent=1 // pred_check_branch
      %9 = sbr.rel (0) target = $region5
    $region4: #{tpu_custom_call.1} parent=1 // pred_region
      %11 = vsyncadd [#allocation3], 0
      %s12 = sshll.u32 %s0, 4
      %s13 = int_to_ptr.hbm [resolvable:$true] %s12
      %s14 = sshll.u32 [#allocation2], 4
      %s15 = int_to_ptr.vmem [resolvable:$true] %s14
      %20 = dma.hbm_to_vmem [thread:$0]  %s13, 2048, %s15, [#allocation3], 1024, 1024, 64
    $region5: #{tpu_custom_call.1} parent=1 // pred_fallthru
      _
    // Predicated region
    $region6: #{tpu_custom_call.1} parent=1 // pred_check
      _
    $region7: #{tpu_custom_call.1} parent=1 // pred_check_branch
      %22 = sbr.rel (0) target = $region9
    $region8: #{tpu_custom_call.1} parent=1 // pred_region
      %24 = dma.done [#allocation3], 2048
    $region9: #{tpu_custom_call.1} parent=1 // pred_fallthru
      _
    %v25 = vld [vmem:[#allocation2] sm:$0xff]
    %v26 = vld [vmem:[#allocation2 + $0x8] sm:$0xff]
    %v27 = vld [vmem:[#allocation2 + $0x10] sm:$0xff]
    %v28 = vld [vmem:[#allocation2 + $0x18] sm:$0xff]
    %v29 = vld [vmem:[#allocation2 + $0x20] sm:$0xff]
    %v30 = vld [vmem:[#allocation2 + $0x28] sm:$0xff]
    %v31 = vld [vmem:[#allocation2 + $0x30] sm:$0xff]
    %v32 = vld [vmem:[#allocation2 + $0x38] sm:$0xff]
    %v33 = vld [vmem:[#allocation2 + $0x40] sm:$0xff]
    %v34 = vld [vmem:[#allocation2 + $0x48] sm:$0xff]
    %v35 = vld [vmem:[#allocation2 + $0x50] sm:$0xff]
    %v36 = vld [vmem:[#allocation2 + $0x58] sm:$0xff]
    %v37 = vld [vmem:[#allocation2 + $0x60] sm:$0xff]
    %v38 = vld [vmem:[#allocation2 + $0x68] sm:$0xff]
    %v39 = vld [vmem:[#allocation2 + $0x70] sm:$0xff]
    %v40 = vld [vmem:[#allocation2 + $0x78] sm:$0xff]
    %v41 = vmul.f32 %v25, 1.442695
    %v42 = vpow.pop %v41
    %v43 = vmul.f32 %v26, 1.442695
    %v44 = vpow.pop %v43
    %v45 = vmul.f32 %v27, 1.442695
    %v46 = vpow.pop %v45
    %v47 = vmul.f32 %v28, 1.442695
    %v48 = vpow.pop %v47
    %v49 = vmul.f32 %v29, 1.442695
    %v50 = vpow.pop %v49
    %v51 = vmul.f32 %v30, 1.442695
    %v52 = vpow.pop %v51
    %v53 = vmul.f32 %v31, 1.442695
    %v54 = vpow.pop %v53
    %v55 = vmul.f32 %v32, 1.442695
    %v56 = vpow.pop %v55
    %v57 = vmul.f32 %v33, 1.442695
    %v58 = vpow.pop %v57
    %v59 = vmul.f32 %v34, 1.442695
    %v60 = vpow.pop %v59
    %v61 = vmul.f32 %v35, 1.442695
    %v62 = vpow.pop %v61
    %v63 = vmul.f32 %v36, 1.442695
    %v64 = vpow.pop %v63
    %v65 = vmul.f32 %v37, 1.442695
    %v66 = vpow.pop %v65
    %v67 = vmul.f32 %v38, 1.442695
    %v68 = vpow.pop %v67
    %v69 = vmul.f32 %v39, 1.442695
    %v70 = vpow.pop %v69
    %v71 = vmul.f32 %v40, 1.442695
    %v72 = vpow.pop %v71
    %73 = vst [vmem:[#allocation5] sm:$0xff] %v42
    %74 = vst [vmem:[#allocation5 + $0x8] sm:$0xff] %v44
    %75 = vst [vmem:[#allocation5 + $0x10] sm:$0xff] %v46
    %76 = vst [vmem:[#allocation5 + $0x18] sm:$0xff] %v48
    %77 = vst [vmem:[#allocation5 + $0x20] sm:$0xff] %v50
    %78 = vst [vmem:[#allocation5 + $0x28] sm:$0xff] %v52
    %79 = vst [vmem:[#allocation5 + $0x30] sm:$0xff] %v54
    %80 = vst [vmem:[#allocation5 + $0x38] sm:$0xff] %v56
    %81 = vst [vmem:[#allocation5 + $0x40] sm:$0xff] %v58
    %82 = vst [vmem:[#allocation5 + $0x48] sm:$0xff] %v60
    %83 = vst [vmem:[#allocation5 + $0x50] sm:$0xff] %v62
    %84 = vst [vmem:[#allocation5 + $0x58] sm:$0xff] %v64
    %85 = vst [vmem:[#allocation5 + $0x60] sm:$0xff] %v66
    %86 = vst [vmem:[#allocation5 + $0x68] sm:$0xff] %v68
    %87 = vst [vmem:[#allocation5 + $0x70] sm:$0xff] %v70
    %88 = vst [vmem:[#allocation5 + $0x78] sm:$0xff] %v72
    // Predicated region
    $region10: #{tpu_custom_call.1} parent=1 // pred_check
      _
    $region11: #{tpu_custom_call.1} parent=1 // pred_check_branch
      %90 = sbr.rel (0) target = $region13
    $region12: #{tpu_custom_call.1} parent=1 // pred_region
      %92 = vsyncadd [#allocation4], 0
      %s93 = sshll.u32 [#allocation5], 4
      %s94 = int_to_ptr.vmem [resolvable:$true] %s93
      %s95 = sshll.u32 %s1, 4
      %s96 = int_to_ptr.hbm [resolvable:$true] %s95
      %101 = dma.vmem_to_hbm [thread:$0]  %s94, 2048, %s96, [#allocation4], 1024, 1024, 64
    $region13: #{tpu_custom_call.1} parent=1 // pred_fallthru
      _
    // Predicated region
    $region14: #{tpu_custom_call.1} parent=1 // pred_check
      _
    $region15: #{tpu_custom_call.1} parent=1 // pred_check_branch
      %103 = sbr.rel (0) target = $region17
    $region16: #{tpu_custom_call.1} parent=1 // pred_region
      %105 = dma.done [#allocation4], 2048
    $region17: #{tpu_custom_call.1} parent=1 // pred_fallthru
      _
    %106 = vsyncpa [#allocation3], 1
    %107 = vsyncpa [#allocation4], 1

</llo_original>
